<compile_context>
chip_gen: v7x
topology: tpu7x:2x2x1
jax: 0.10.0
libtpu: 0.0.40
codegen_flags: <defaults>
</compile_context>

<pallas_src>
import functools

import jax
import jax.numpy as jnp
from jax.experimental import pallas as pl
from jax.experimental.pallas import tpu as pltpu


# -----------------------------------------------------------------------------
# VMEM budget per generation (v5e/v6e: 128 MiB physical, v7x: 64 MiB).
# -----------------------------------------------------------------------------
def _vmem_limit_bytes():
    try:
        cap = getattr(pltpu.get_tpu_info(), "vmem_capacity_bytes", None)
        if cap:
            return int(min(cap * 3 // 4, 100 * 1024 * 1024))
    except Exception:
        pass
    return 48 * 1024 * 1024


# -----------------------------------------------------------------------------
# One GAT layer (all heads fused) as a tiled Pallas kernel.
#   grid = (row_tiles, col_tiles); col axis is the reduction axis (last).
# -----------------------------------------------------------------------------
def _gat_layer_kernel(mask_ref, x_ref, w_ref, vsum_ref, o_ref,
                      acc_ref, deg_ref, *, activation, num_nodes):
    c = pl.program_id(1)

    @pl.when(c == 0)
    def _init():
        acc_ref[...] = jnp.zeros_like(acc_ref)
        deg_ref[...] = jnp.zeros_like(deg_ref)

    # bf16 0/1 neighbor mask tile for this (row_block, col_block).
    mask = mask_ref[...]                                            # [rt, ct] bf16

    # Per-head value tile for this column block of nodes, all heads packed:
    # v = x[col_block] @ W_all   (f32 MXU), then bf16 for the big matmul.
    v = jnp.dot(x_ref[...], w_ref[...],
                preferred_element_type=jnp.float32)                 # [ct, HC]
    v16 = v.astype(jnp.bfloat16)

    # Numerator accumulation: mask @ v (MXU, f32 accumulate).
    acc_ref[...] += jnp.dot(mask, v16, preferred_element_type=jnp.float32)
    # Degree accumulation folded into the MXU: mask @ ones column.
    ones_col = jnp.ones((mask.shape[1], 1), jnp.bfloat16)
    deg_ref[...] += jnp.dot(mask, ones_col, preferred_element_type=jnp.float32)

    @pl.when(c == pl.num_programs(1) - 1)
    def _finalize():
        deg = deg_ref[...]                                          # [rt, 1]
        has_nbr = deg > 0.0
        # deg == 0 rows: softmax over all -1e9 is uniform -> mean of v over ALL
        # nodes (vsum / N).  EUP approx reciprocal for the divide.
        denom = jnp.where(has_nbr, deg, jnp.float32(num_nodes))
        inv = pl.reciprocal(denom, approx=True)                     # [rt, 1]
        numer = jnp.where(has_nbr, acc_ref[...], vsum_ref[...])     # [rt, HC]
        h = numer * inv
        if activation == "elu":
            h = jnp.where(h > 0.0, h, jnp.exp(jnp.minimum(h, 0.0)) - 1.0)
        elif activation == "sigmoid":
            h = pl.reciprocal(1.0 + jnp.exp(-h), approx=True)
        o_ref[...] = h.astype(o_ref.dtype)


def _gat_layer(x, adj_mask, w_all, *, activation, row_tile=None, col_tile=None):
    n = adj_mask.shape[0]
    c_in = x.shape[1]
    hc = w_all.shape[1]
    rt = n if row_tile is None else min(int(row_tile), n)
    ct = n if col_tile is None else min(int(col_tile), n)
    assert n % rt == 0 and n % ct == 0, "num_nodes must be divisible by tile sizes"
    assert rt == n or rt % 8 == 0, "row tile must be full or a multiple of 8"
    assert ct == n or ct % 128 == 0, "col tile must be full or a multiple of 128"

    # Column-sum of the value matrix (deg==0 fallback = uniform mean over all
    # nodes).  O(N*C) work, done once in XLA instead of once per row tile.
    vsum = jnp.matmul(jnp.sum(x, axis=0, keepdims=True), w_all,
                      precision=jax.lax.Precision.HIGHEST)          # [1, HC]

    grid = (n // rt, n // ct)
    kernel = functools.partial(_gat_layer_kernel, activation=activation,
                               num_nodes=n)
    return pl.pallas_call(
        kernel,
        out_shape=jax.ShapeDtypeStruct((n, hc), jnp.float32),
        grid_spec=pltpu.PrefetchScalarGridSpec(
            num_scalar_prefetch=0,
            grid=grid,
            in_specs=[
                # O(N^2) bf16 mask, streamed per (row, col) tile, double-buffered.
                pl.BlockSpec((rt, ct), lambda r, c: (r, c)),
                # node features for the current column block (value inputs).
                pl.BlockSpec((ct, c_in), lambda r, c: (c, 0)),
                # packed per-head value weights: constant index map -> resident.
                pl.BlockSpec((c_in, hc), lambda r, c: (0, 0)),
                # value column-sum (isolated-node fallback): resident.
                pl.BlockSpec((1, hc), lambda r, c: (0, 0)),
            ],
            out_specs=pl.BlockSpec((rt, hc), lambda r, c: (r, 0)),
            scratch_shapes=[
                pltpu.VMEM((rt, hc), jnp.float32),   # mask @ v accumulator
                pltpu.VMEM((rt, 1), jnp.float32),    # degree accumulator
            ],
        ),
        compiler_params=pltpu.CompilerParams(
            dimension_semantics=("parallel", "arbitrary"),
            vmem_limit_bytes=_vmem_limit_bytes(),
        ),
    )(adj_mask, x, w_all, vsum)


# -----------------------------------------------------------------------------
# Whole model (two layers + ELU + Sigmoid), weights packed head-major.
# -----------------------------------------------------------------------------
def _pack_value_weights(linear_weight):
    """Pack [H, Cin, Cout] -> [Cout, H*Cin] with W_all[:, h*Cin:(h+1)*Cin] = W[h].T

    so that x @ W_all == concat_h((W[h] @ x.T).T), i.e. all heads' value tensors
    already in the final packed [N, H*Cin] layout of the reference.
    """
    h, c_in, c_out = linear_weight.shape
    return jnp.transpose(linear_weight, (2, 0, 1)).reshape(c_out, h * c_in)


@functools.partial(jax.jit, static_argnames=("row_tile", "col_tile"))
def _fused_gat_forward(x, adj_mask, w1_all, w2_all, *, row_tile=None,
                       col_tile=None):
    h1 = _gat_layer(x, adj_mask, w1_all, activation="elu",
                    row_tile=row_tile, col_tile=col_tile)
    return _gat_layer(h1, adj_mask, w2_all, activation="sigmoid",
                      row_tile=row_tile, col_tile=col_tile)


def to_dense_adj(edge_index, max_num_nodes):
    """JAX equivalent of torch_geometric.utils.to_dense_adj (single graph)."""
    adj = jnp.zeros((max_num_nodes, max_num_nodes), dtype=jnp.float32)
    adj = adj.at[edge_index[0], edge_index[1]].add(1.0)
    return adj


def gat_model_forward(params, x, edge_index, *, row_tile=None, col_tile=None):
    adj = to_dense_adj(edge_index, params.num_nodes)
    # bf16 0/1 mask built ONCE here and streamed by both layers (exact values).
    adj_mask = (adj != 0.0).astype(jnp.bfloat16)
    w1_all = _pack_value_weights(params.gat1["linear_weight"])   # [Cin, H*hid]
    w2_all = _pack_value_weights(params.gat2["linear_weight"])   # [H*hid, H*C2]
    # query/key weights are mathematically inert in this forward (see header);
    # kept in params for parity and used only by the reference checker.
    return _fused_gat_forward(x, adj_mask, w1_all, w2_all,
                              row_tile=row_tile, col_tile=col_tile)


# -----------------------------------------------------------------------------
# Parameters (mirrors GATModel.__init__ with the Cin == Cout shape constraint
# the PyTorch matmuls impose).
# -----------------------------------------------------------------------------
class GATModelParams:
    def __init__(self, key, *, num_nodes, num_heads, in_channels, hidden,
                 w_scale=1.0):
        assert hidden == in_channels, "reference matmuls require hidden == in_channels"
        k1, k2, k3, k4, k5, k6 = jax.random.split(key, 6)
        c1 = in_channels                 # gat1: per-head out width == in_channels
        c2 = num_heads * hidden          # gat2: in == out == num_heads * hidden
        self.num_nodes = num_nodes
        self.gat1 = dict(
            linear_weight=w_scale * jax.random.normal(k1, (num_heads, c1, hidden), jnp.float32),
            query_weight=w_scale * jax.random.normal(k2, (num_heads, 1, hidden), jnp.float32),
            key_weight=w_scale * jax.random.normal(k3, (num_heads, 1, hidden), jnp.float32),
        )
        self.gat2 = dict(
            linear_weight=w_scale * jax.random.normal(k4, (num_heads, c2, c2), jnp.float32),
            query_weight=w_scale * jax.random.normal(k5, (num_heads, 1, c2), jnp.float32),
            key_weight=w_scale * jax.random.normal(k6, (num_heads, 1, c2), jnp.float32),
        )


# -----------------------------------------------------------------------------
# Literal pure-JAX reference (follows the PyTorch math step by step, including
# the q/k/LeakyReLU/softmax path) used to validate the fused kernels.
# -----------------------------------------------------------------------------
def _reference_gat_layer(x, adj, linear_weight, query_weight, key_weight,
                         slope=0.2):
    hp = jax.lax.Precision.HIGHEST
    lti = jnp.einsum("hij,nj->hin", linear_weight, x, precision=hp)      # [H,Cin,N]
    q = jnp.einsum("hoj,hjn->hon", query_weight, lti, precision=hp)      # [H,1,N]
    k = jnp.einsum("hoj,hjn->hon", key_weight, lti, precision=hp)        # [H,1,N]
    v = jnp.transpose(lti, (0, 2, 1))                                    # [H,N,Cin]
    score = jnp.einsum("hon,hpn->hop", q, k, precision=hp)               # [H,1,1]
    score = jnp.where(score >= 0.0, score, slope * score)
    logits = jnp.where(adj[None] == 0.0, jnp.float32(-1e9), score)       # [H,N,N]
    attn = jax.nn.softmax(logits, axis=-1)
    out = jnp.einsum("hnm,hmc->hnc", attn, v, precision=hp)              # [H,N,Cin]
    n = x.shape[0]
    return jnp.transpose(out, (1, 0, 2)).reshape(n, -1)


def _reference_forward(params, x, edge_index):
    adj = to_dense_adj(edge_index, params.num_nodes)
    h = _reference_gat_layer(x, adj, params.gat1["linear_weight"],
                             params.gat1["query_weight"], params.gat1["key_weight"])
    h = jax.nn.elu(h, alpha=1.0)
    h = _reference_gat_layer(h, adj, params.gat2["linear_weight"],
                             params.gat2["query_weight"], params.gat2["key_weight"])
    return jax.nn.sigmoid(h)


if __name__ == "__main__":
    # ------------------------- Test 1: toy graph (single tile) ---------------
    key = jax.random.PRNGKey(0)
    kx, kp = jax.random.split(key)

    NUM_NODES = 8
    NUM_HEADS = 2
    IN_CHANNELS = 4
    HIDDEN = 4  # must equal IN_CHANNELS

    x = jax.random.normal(kx, (NUM_NODES, IN_CHANNELS), jnp.float32)

    # Deterministic graph; node 6 has NO outgoing edges so its row exercises
    # the uniform (deg == 0) softmax fallback in both layers.
    src = jnp.array([0, 1, 2, 3, 4, 5, 7, 1, 2, 3, 4, 5, 7, 0, 0, 4], dtype=jnp.int32)
    dst = jnp.array([1, 2, 3, 4, 5, 6, 0, 0, 1, 2, 3, 4, 6, 7, 4, 0], dtype=jnp.int32)
    edge_index = jnp.stack([src, dst], axis=0)  # [2, 16]

    params = GATModelParams(kp, num_nodes=NUM_NODES, num_heads=NUM_HEADS,
                            in_channels=IN_CHANNELS, hidden=HIDDEN, w_scale=0.5)

    out = gat_model_forward(params, x, edge_index)
    out = jax.block_until_ready(out)

    assert out.shape == (NUM_NODES, NUM_HEADS * NUM_HEADS * HIDDEN), out.shape
    assert bool(jnp.all(jnp.isfinite(out)))

    ref = _reference_forward(params, x, edge_index)
    max_err = float(jnp.max(jnp.abs(out - ref)))
    assert max_err < 5e-2, f"toy: max abs err vs reference = {max_err}"

    # -------- Test 2: tiled path (grid = (2, 2), 128x128 bf16 mask tiles) ----
    N2, H2, C2 = 256, 2, 128
    kx2, ka2, kp2 = jax.random.split(jax.random.PRNGKey(1), 3)
    x2 = jax.random.normal(kx2, (N2, C2), jnp.float32)
    dense = jax.random.uniform(ka2, (N2, N2)) < 0.05
    src2, dst2 = jnp.nonzero(dense)
    edge_index2 = jnp.stack([src2, dst2], axis=0).astype(jnp.int32)
    params2 = GATModelParams(kp2, num_nodes=N2, num_heads=H2,
                             in_channels=C2, hidden=C2, w_scale=0.05)

    out2 = gat_model_forward(params2, x2, edge_index2, row_tile=128, col_tile=128)
    out2 = jax.block_until_ready(out2)

    assert out2.shape == (N2, H2 * H2 * C2), out2.shape
    assert bool(jnp.all(jnp.isfinite(out2)))

    ref2 = _reference_forward(params2, x2, edge_index2)
    max_err2 = float(jnp.max(jnp.abs(out2 - ref2)))
    assert max_err2 < 5e-2, f"tiled: max abs err vs reference = {max_err2}"

    print("KERNEL_OK")
</pallas_src>

<mosaic_0001>
module attributes {stable_mosaic.version = 11 : i64} {
  func.func @_gat_layer_kernel(%arg0: i32, %arg1: i32, %arg2: memref<8x8xbf16, #tpu.memory_space<vmem>>, %arg3: memref<8x4xf32, #tpu.memory_space<vmem>>, %arg4: memref<4x8xf32, #tpu.memory_space<vmem>>, %arg5: memref<1x8xf32, #tpu.memory_space<vmem>>, %arg6: memref<8x8xf32, #tpu.memory_space<vmem>>, %arg7: memref<8x8xf32, #tpu.memory_space<vmem>>, %arg8: memref<8x1xf32, #tpu.memory_space<vmem>>) attributes {dimension_semantics = [#tpu.dimension_semantics<parallel>, #tpu.dimension_semantics<arbitrary>], iteration_bounds = array<i64: 1, 1>, scalar_prefetch = 0 : i64, scratch_operands = 2 : i64, tpu.core_type = #tpu.core_type<tc>, window_params = [{transform_indices = @transform_0, window_bounds = array<i64: 8, 8>}, {transform_indices = @transform_1, window_bounds = array<i64: 8, 4>}, {pipeline_mode = #tpu.pipeline_mode<synchronous>, transform_indices = @transform_2, window_bounds = array<i64: 4, 8>}, {pipeline_mode = #tpu.pipeline_mode<synchronous>, transform_indices = @transform_3, window_bounds = array<i64: 1, 8>}, {transform_indices = @transform_4, window_bounds = array<i64: 8, 8>}]} {
    %c0_i32 = arith.constant 0 : i32
    %0 = arith.cmpi eq, %arg1, %c0_i32 : i32
    %1 = arith.extui %0 : i1 to i32
    %c0_i32_0 = arith.constant 0 : i32
    %2 = arith.cmpi ne, %1, %c0_i32_0 : i32
    scf.if %2 {
      %cst_19 = arith.constant 0.000000e+00 : f32
      %20 = vector.broadcast %cst_19 : f32 to vector<8x8xf32>
      %c0_20 = arith.constant 0 : index
      %c0_21 = arith.constant 0 : index
      %21 = vector.load %arg7[%c0_20, %c0_21] : memref<8x8xf32, #tpu.memory_space<vmem>>, vector<8x8xf32>
      tpu.vector_store %arg7[%c0_20, %c0_21], %20 {strides = array<i32>} : memref<8x8xf32, #tpu.memory_space<vmem>>, vector<8x8xf32>,
      %cst_22 = arith.constant 0.000000e+00 : f32
      %22 = vector.broadcast %cst_22 : f32 to vector<8x1xf32>
      %c0_23 = arith.constant 0 : index
      %c0_24 = arith.constant 0 : index
      %23 = vector.load %arg8[%c0_23, %c0_24] : memref<8x1xf32, #tpu.memory_space<vmem>>, vector<8x1xf32>
      tpu.vector_store %arg8[%c0_23, %c0_24], %22 {strides = array<i32>} : memref<8x1xf32, #tpu.memory_space<vmem>>, vector<8x1xf32>,
    } else {
    }
    %c0 = arith.constant 0 : index
    %c0_1 = arith.constant 0 : index
    %3 = vector.load %arg2[%c0, %c0_1] : memref<8x8xbf16, #tpu.memory_space<vmem>>, vector<8x8xbf16>
    %c0_2 = arith.constant 0 : index
    %c0_3 = arith.constant 0 : index
    %4 = vector.load %arg3[%c0_2, %c0_3] : memref<8x4xf32, #tpu.memory_space<vmem>>, vector<8x4xf32>
    %c0_4 = arith.constant 0 : index
    %c0_5 = arith.constant 0 : index
    %5 = vector.load %arg4[%c0_4, %c0_5] : memref<4x8xf32, #tpu.memory_space<vmem>>, vector<4x8xf32>
    %cst = arith.constant dense<0.000000e+00> : vector<8x8xf32>
    %6 = tpu.matmul %4, %5, %cst {dimension_numbers = #tpu.dot_dimension_numbers<[1], [0], [0], [1], [0, 0, 1, 1], [], []>} : vector<8x4xf32>, vector<4x8xf32>, vector<8x8xf32> -> vector<8x8xf32>
    %7 = arith.truncf %6 : vector<8x8xf32> to vector<8x8xbf16>
    %c0_6 = arith.constant 0 : index
    %c0_7 = arith.constant 0 : index
    %8 = vector.load %arg7[%c0_6, %c0_7] : memref<8x8xf32, #tpu.memory_space<vmem>>, vector<8x8xf32>
    %cst_8 = arith.constant dense<0.000000e+00> : vector<8x8xf32>
    %9 = tpu.matmul %3, %7, %cst_8 {dimension_numbers = #tpu.dot_dimension_numbers<[1], [0], [0], [1], [0, 0, 1, 1], [], []>} : vector<8x8xbf16>, vector<8x8xbf16>, vector<8x8xf32> -> vector<8x8xf32>
    %10 = arith.addf %8, %9 : vector<8x8xf32>
    %c0_9 = arith.constant 0 : index
    %c0_10 = arith.constant 0 : index
    %11 = vector.load %arg7[%c0_9, %c0_10] : memref<8x8xf32, #tpu.memory_space<vmem>>, vector<8x8xf32>
    tpu.vector_store %arg7[%c0_9, %c0_10], %10 {strides = array<i32>} : memref<8x8xf32, #tpu.memory_space<vmem>>, vector<8x8xf32>,
    %cst_11 = arith.constant 1.000000e+00 : bf16
    %12 = vector.broadcast %cst_11 : bf16 to vector<8x1xbf16>
    %c0_12 = arith.constant 0 : index
    %c0_13 = arith.constant 0 : index
    %13 = vector.load %arg8[%c0_12, %c0_13] : memref<8x1xf32, #tpu.memory_space<vmem>>, vector<8x1xf32>
    %cst_14 = arith.constant dense<0.000000e+00> : vector<8x1xf32>
    %14 = tpu.matmul %3, %12, %cst_14 {dimension_numbers = #tpu.dot_dimension_numbers<[1], [0], [0], [1], [0, 0, 1, 1], [], []>} : vector<8x8xbf16>, vector<8x1xbf16>, vector<8x1xf32> -> vector<8x1xf32>
    %15 = arith.addf %13, %14 : vector<8x1xf32>
    %c0_15 = arith.constant 0 : index
    %c0_16 = arith.constant 0 : index
    %16 = vector.load %arg8[%c0_15, %c0_16] : memref<8x1xf32, #tpu.memory_space<vmem>>, vector<8x1xf32>
    tpu.vector_store %arg8[%c0_15, %c0_16], %15 {strides = array<i32>} : memref<8x1xf32, #tpu.memory_space<vmem>>, vector<8x1xf32>,
    %c0_i32_17 = arith.constant 0 : i32
    %17 = arith.cmpi eq, %arg1, %c0_i32_17 : i32
    %18 = arith.extui %17 : i1 to i32
    %c0_i32_18 = arith.constant 0 : i32
    %19 = arith.cmpi ne, %18, %c0_i32_18 : i32
    scf.if %19 {
      %c0_19 = arith.constant 0 : index
      %c0_20 = arith.constant 0 : index
      %20 = vector.load %arg8[%c0_19, %c0_20] : memref<8x1xf32, #tpu.memory_space<vmem>>, vector<8x1xf32>
      %cst_21 = arith.constant 0.000000e+00 : f32
      %21 = vector.broadcast %cst_21 : f32 to vector<8x1xf32>
      %22 = arith.cmpf ogt, %20, %21 : vector<8x1xf32>
      %cst_22 = arith.constant 8.000000e+00 : f32
      %23 = vector.broadcast %cst_22 : f32 to vector<8x1xf32>
      %24 = arith.select %22, %20, %23 : vector<8x1xi1>, vector<8x1xf32>
      %25 = tpu.reciprocal %24 {approx = true} : vector<8x1xf32> -> vector<8x1xf32>
      %c0_23 = arith.constant 0 : index
      %c0_24 = arith.constant 0 : index
      %26 = vector.load %arg7[%c0_23, %c0_24] : memref<8x8xf32, #tpu.memory_space<vmem>>, vector<8x8xf32>
      %c0_25 = arith.constant 0 : index
      %c0_26 = arith.constant 0 : index
      %27 = vector.load %arg5[%c0_25, %c0_26] : memref<1x8xf32, #tpu.memory_space<vmem>>, vector<1x8xf32>
      %28 = vector.shape_cast %22 : vector<8x1xi1> to vector<8x1xi1>
      %29 = vector.broadcast %28 : vector<8x1xi1> to vector<8x8xi1>
      %30 = vector.shape_cast %27 : vector<1x8xf32> to vector<1x8xf32>
      %31 = vector.broadcast %30 : vector<1x8xf32> to vector<8x8xf32>
      %32 = arith.select %29, %26, %31 : vector<8x8xi1>, vector<8x8xf32>
      %33 = vector.broadcast %25 : vector<8x1xf32> to vector<8x8xf32>
      %34 = arith.mulf %32, %33 : vector<8x8xf32>
      %cst_27 = arith.constant 0.000000e+00 : f32
      %35 = vector.broadcast %cst_27 : f32 to vector<8x8xf32>
      %36 = arith.cmpf ogt, %34, %35 : vector<8x8xf32>
      %cst_28 = arith.constant 0.000000e+00 : f32
      %37 = vector.broadcast %cst_28 : f32 to vector<8x8xf32>
      %38 = arith.minimumf %34, %37 : vector<8x8xf32>
      %39 = math.exp %38 : vector<8x8xf32>
      %cst_29 = arith.constant 1.000000e+00 : f32
      %40 = vector.broadcast %cst_29 : f32 to vector<8x8xf32>
      %41 = arith.subf %39, %40 : vector<8x8xf32>
      %42 = arith.select %36, %34, %41 : vector<8x8xi1>, vector<8x8xf32>
      %c0_30 = arith.constant 0 : index
      %c0_31 = arith.constant 0 : index
      %43 = vector.load %arg6[%c0_30, %c0_31] : memref<8x8xf32, #tpu.memory_space<vmem>>, vector<8x8xf32>
      tpu.vector_store %arg6[%c0_30, %c0_31], %42 {strides = array<i32>} : memref<8x8xf32, #tpu.memory_space<vmem>>, vector<8x8xf32>,
    } else {
    }
    return
  }
  func.func @transform_0(%arg0: i32, %arg1: i32) -> (i32, i32) {
    %c0_i32 = arith.constant 0 : i32
    return %arg0, %arg1 : i32, i32
  }
  func.func @transform_1(%arg0: i32, %arg1: i32) -> (i32, i32) {
    %c0_i32 = arith.constant 0 : i32
    %c0_i32_0 = arith.constant 0 : i32
    return %arg1, %c0_i32 : i32, i32
  }
  func.func @transform_2(%arg0: i32, %arg1: i32) -> (i32, i32) {
    %c0_i32 = arith.constant 0 : i32
    %c0_i32_0 = arith.constant 0 : i32
    %c0_i32_1 = arith.constant 0 : i32
    return %c0_i32, %c0_i32_0 : i32, i32
  }
  func.func @transform_3(%arg0: i32, %arg1: i32) -> (i32, i32) {
    %c0_i32 = arith.constant 0 : i32
    %c0_i32_0 = arith.constant 0 : i32
    %c0_i32_1 = arith.constant 0 : i32
    return %c0_i32, %c0_i32_0 : i32, i32
  }
  func.func @transform_4(%arg0: i32, %arg1: i32) -> (i32, i32) {
    %c0_i32 = arith.constant 0 : i32
    %c0_i32_0 = arith.constant 0 : i32
    return %arg0, %c0_i32 : i32, i32
  }
}

module attributes {stable_mosaic.version = 11 : i64} {
  func.func @_gat_layer_kernel(%arg0: i32, %arg1: i32, %arg2: memref<8x8xbf16, #tpu.memory_space<vmem>>, %arg3: memref<8x8xf32, #tpu.memory_space<vmem>>, %arg4: memref<8x16xf32, #tpu.memory_space<vmem>>, %arg5: memref<1x16xf32, #tpu.memory_space<vmem>>, %arg6: memref<8x16xf32, #tpu.memory_space<vmem>>, %arg7: memref<8x16xf32, #tpu.memory_space<vmem>>, %arg8: memref<8x1xf32, #tpu.memory_space<vmem>>) attributes {dimension_semantics = [#tpu.dimension_semantics<parallel>, #tpu.dimension_semantics<arbitrary>], iteration_bounds = array<i64: 1, 1>, scalar_prefetch = 0 : i64, scratch_operands = 2 : i64, tpu.core_type = #tpu.core_type<tc>, window_params = [{transform_indices = @transform_0, window_bounds = array<i64: 8, 8>}, {transform_indices = @transform_1, window_bounds = array<i64: 8, 8>}, {pipeline_mode = #tpu.pipeline_mode<synchronous>, transform_indices = @transform_2, window_bounds = array<i64: 8, 16>}, {pipeline_mode = #tpu.pipeline_mode<synchronous>, transform_indices = @transform_3, window_bounds = array<i64: 1, 16>}, {transform_indices = @transform_4, window_bounds = array<i64: 8, 16>}]} {
    %c0_i32 = arith.constant 0 : i32
    %0 = arith.cmpi eq, %arg1, %c0_i32 : i32
    %1 = arith.extui %0 : i1 to i32
    %c0_i32_0 = arith.constant 0 : i32
    %2 = arith.cmpi ne, %1, %c0_i32_0 : i32
    scf.if %2 {
      %cst_19 = arith.constant 0.000000e+00 : f32
      %20 = vector.broadcast %cst_19 : f32 to vector<8x16xf32>
      %c0_20 = arith.constant 0 : index
      %c0_21 = arith.constant 0 : index
      %21 = vector.load %arg7[%c0_20, %c0_21] : memref<8x16xf32, #tpu.memory_space<vmem>>, vector<8x16xf32>
      tpu.vector_store %arg7[%c0_20, %c0_21], %20 {strides = array<i32>} : memref<8x16xf32, #tpu.memory_space<vmem>>, vector<8x16xf32>,
      %cst_22 = arith.constant 0.000000e+00 : f32
      %22 = vector.broadcast %cst_22 : f32 to vector<8x1xf32>
      %c0_23 = arith.constant 0 : index
      %c0_24 = arith.constant 0 : index
      %23 = vector.load %arg8[%c0_23, %c0_24] : memref<8x1xf32, #tpu.memory_space<vmem>>, vector<8x1xf32>
      tpu.vector_store %arg8[%c0_23, %c0_24], %22 {strides = array<i32>} : memref<8x1xf32, #tpu.memory_space<vmem>>, vector<8x1xf32>,
    } else {
    }
    %c0 = arith.constant 0 : index
    %c0_1 = arith.constant 0 : index
    %3 = vector.load %arg2[%c0, %c0_1] : memref<8x8xbf16, #tpu.memory_space<vmem>>, vector<8x8xbf16>
    %c0_2 = arith.constant 0 : index
    %c0_3 = arith.constant 0 : index
    %4 = vector.load %arg3[%c0_2, %c0_3] : memref<8x8xf32, #tpu.memory_space<vmem>>, vector<8x8xf32>
    %c0_4 = arith.constant 0 : index
    %c0_5 = arith.constant 0 : index
    %5 = vector.load %arg4[%c0_4, %c0_5] : memref<8x16xf32, #tpu.memory_space<vmem>>, vector<8x16xf32>
    %cst = arith.constant dense<0.000000e+00> : vector<8x16xf32>
    %6 = tpu.matmul %4, %5, %cst {dimension_numbers = #tpu.dot_dimension_numbers<[1], [0], [0], [1], [0, 0, 1, 1], [], []>} : vector<8x8xf32>, vector<8x16xf32>, vector<8x16xf32> -> vector<8x16xf32>
    %7 = arith.truncf %6 : vector<8x16xf32> to vector<8x16xbf16>
    %c0_6 = arith.constant 0 : index
    %c0_7 = arith.constant 0 : index
    %8 = vector.load %arg7[%c0_6, %c0_7] : memref<8x16xf32, #tpu.memory_space<vmem>>, vector<8x16xf32>
    %cst_8 = arith.constant dense<0.000000e+00> : vector<8x16xf32>
    %9 = tpu.matmul %3, %7, %cst_8 {dimension_numbers = #tpu.dot_dimension_numbers<[1], [0], [0], [1], [0, 0, 1, 1], [], []>} : vector<8x8xbf16>, vector<8x16xbf16>, vector<8x16xf32> -> vector<8x16xf32>
    %10 = arith.addf %8, %9 : vector<8x16xf32>
    %c0_9 = arith.constant 0 : index
    %c0_10 = arith.constant 0 : index
    %11 = vector.load %arg7[%c0_9, %c0_10] : memref<8x16xf32, #tpu.memory_space<vmem>>, vector<8x16xf32>
    tpu.vector_store %arg7[%c0_9, %c0_10], %10 {strides = array<i32>} : memref<8x16xf32, #tpu.memory_space<vmem>>, vector<8x16xf32>,
    %cst_11 = arith.constant 1.000000e+00 : bf16
    %12 = vector.broadcast %cst_11 : bf16 to vector<8x1xbf16>
    %c0_12 = arith.constant 0 : index
    %c0_13 = arith.constant 0 : index
    %13 = vector.load %arg8[%c0_12, %c0_13] : memref<8x1xf32, #tpu.memory_space<vmem>>, vector<8x1xf32>
    %cst_14 = arith.constant dense<0.000000e+00> : vector<8x1xf32>
    %14 = tpu.matmul %3, %12, %cst_14 {dimension_numbers = #tpu.dot_dimension_numbers<[1], [0], [0], [1], [0, 0, 1, 1], [], []>} : vector<8x8xbf16>, vector<8x1xbf16>, vector<8x1xf32> -> vector<8x1xf32>
    %15 = arith.addf %13, %14 : vector<8x1xf32>
    %c0_15 = arith.constant 0 : index
    %c0_16 = arith.constant 0 : index
    %16 = vector.load %arg8[%c0_15, %c0_16] : memref<8x1xf32, #tpu.memory_space<vmem>>, vector<8x1xf32>
    tpu.vector_store %arg8[%c0_15, %c0_16], %15 {strides = array<i32>} : memref<8x1xf32, #tpu.memory_space<vmem>>, vector<8x1xf32>,
    %c0_i32_17 = arith.constant 0 : i32
    %17 = arith.cmpi eq, %arg1, %c0_i32_17 : i32
    %18 = arith.extui %17 : i1 to i32
    %c0_i32_18 = arith.constant 0 : i32
    %19 = arith.cmpi ne, %18, %c0_i32_18 : i32
    scf.if %19 {
      %c0_19 = arith.constant 0 : index
      %c0_20 = arith.constant 0 : index
      %20 = vector.load %arg8[%c0_19, %c0_20] : memref<8x1xf32, #tpu.memory_space<vmem>>, vector<8x1xf32>
      %cst_21 = arith.constant 0.000000e+00 : f32
      %21 = vector.broadcast %cst_21 : f32 to vector<8x1xf32>
      %22 = arith.cmpf ogt, %20, %21 : vector<8x1xf32>
      %cst_22 = arith.constant 8.000000e+00 : f32
      %23 = vector.broadcast %cst_22 : f32 to vector<8x1xf32>
      %24 = arith.select %22, %20, %23 : vector<8x1xi1>, vector<8x1xf32>
      %25 = tpu.reciprocal %24 {approx = true} : vector<8x1xf32> -> vector<8x1xf32>
      %c0_23 = arith.constant 0 : index
      %c0_24 = arith.constant 0 : index
      %26 = vector.load %arg7[%c0_23, %c0_24] : memref<8x16xf32, #tpu.memory_space<vmem>>, vector<8x16xf32>
      %c0_25 = arith.constant 0 : index
      %c0_26 = arith.constant 0 : index
      %27 = vector.load %arg5[%c0_25, %c0_26] : memref<1x16xf32, #tpu.memory_space<vmem>>, vector<1x16xf32>
      %28 = vector.shape_cast %22 : vector<8x1xi1> to vector<8x1xi1>
      %29 = vector.broadcast %28 : vector<8x1xi1> to vector<8x16xi1>
      %30 = vector.shape_cast %27 : vector<1x16xf32> to vector<1x16xf32>
      %31 = vector.broadcast %30 : vector<1x16xf32> to vector<8x16xf32>
      %32 = arith.select %29, %26, %31 : vector<8x16xi1>, vector<8x16xf32>
      %33 = vector.broadcast %25 : vector<8x1xf32> to vector<8x16xf32>
      %34 = arith.mulf %32, %33 : vector<8x16xf32>
      %cst_27 = arith.constant 0.000000e+00 : f32
      %35 = vector.broadcast %cst_27 : f32 to vector<8x16xf32>
      %36 = arith.subf %35, %34 : vector<8x16xf32>
      %37 = math.exp %36 : vector<8x16xf32>
      %cst_28 = arith.constant 1.000000e+00 : f32
      %38 = vector.broadcast %cst_28 : f32 to vector<8x16xf32>
      %39 = arith.addf %38, %37 : vector<8x16xf32>
      %40 = tpu.reciprocal %39 {approx = true} : vector<8x16xf32> -> vector<8x16xf32>
      %c0_29 = arith.constant 0 : index
      %c0_30 = arith.constant 0 : index
      %41 = vector.load %arg6[%c0_29, %c0_30] : memref<8x16xf32, #tpu.memory_space<vmem>>, vector<8x16xf32>
      tpu.vector_store %arg6[%c0_29, %c0_30], %40 {strides = array<i32>} : memref<8x16xf32, #tpu.memory_space<vmem>>, vector<8x16xf32>,
    } else {
    }
    return
  }
  func.func @transform_0(%arg0: i32, %arg1: i32) -> (i32, i32) {
    %c0_i32 = arith.constant 0 : i32
    return %arg0, %arg1 : i32, i32
  }
  func.func @transform_1(%arg0: i32, %arg1: i32) -> (i32, i32) {
    %c0_i32 = arith.constant 0 : i32
    %c0_i32_0 = arith.constant 0 : i32
    return %arg1, %c0_i32 : i32, i32
  }
  func.func @transform_2(%arg0: i32, %arg1: i32) -> (i32, i32) {
    %c0_i32 = arith.constant 0 : i32
    %c0_i32_0 = arith.constant 0 : i32
    %c0_i32_1 = arith.constant 0 : i32
    return %c0_i32, %c0_i32_0 : i32, i32
  }
  func.func @transform_3(%arg0: i32, %arg1: i32) -> (i32, i32) {
    %c0_i32 = arith.constant 0 : i32
    %c0_i32_0 = arith.constant 0 : i32
    %c0_i32_1 = arith.constant 0 : i32
    return %c0_i32, %c0_i32_0 : i32, i32
  }
  func.func @transform_4(%arg0: i32, %arg1: i32) -> (i32, i32) {
    %c0_i32 = arith.constant 0 : i32
    %c0_i32_0 = arith.constant 0 : i32
    return %arg0, %c0_i32 : i32, i32
  }
}

</mosaic_0001>

<llo_original>
// kernel: _fused_gat_forward.3
$region0: #{_fused_gat_forward.3}
  #allocation0 [shape = 'u32[]', space=smem, size = 0x4, offset = 0x4, fixed_abs, tag = 'smem constant byte address 0x4 - core index']
  #allocation1 [shape = 'u32[144,128]{1,0:T(1,128)}', space=vmem, size = 0x12000, scoped, tag = 'internal scratch']
  #allocation2 [shape = 'f32[8,16]{1,0:T(8,128)}', space=vmem, size = 0x1000, scoped, tag = 'scratch operand']
  #allocation3 [shape = 'f32[8,1]{1,0:T(8,128)}', space=vmem, size = 0x1000, scoped, tag = 'scratch operand']
  %s0 = inlined_call_operand.vmem [shape: bf16[8,8], index: 0, kind: input, shape index: {}]
  %s1 = inlined_call_operand.vmem [shape: f32[8,8], index: 1, kind: input, shape index: {}]
  %s2 = inlined_call_operand.vmem [shape: f32[8,16], index: 2, kind: input, shape index: {}]
  %s3 = inlined_call_operand.vmem [shape: f32[1,16], index: 3, kind: input, shape index: {}]
  %s4 = inlined_call_operand.hbm [shape: f32[8,16], index: 4, kind: output, shape index: {}]
  %s5 = sld [smem:[#allocation0]]
  $region34: #{_fused_gat_forward.3} parent=0
    _
  %s7 = ssub.s32 1, %s5
  %s8 = scalar_select 0, %s7, %s5
  $region1: #{_fused_gat_forward.3} parent=0
    #allocation4 [shape = 'u8[4096]{0}', space=vmem, size = 0x1000, scoped, tag = 'output window, operand 0, single buffered']
    #allocation5 [shape = 's32[1]{0}', space=sflag, size = 0x4, scoped, tag = 'scoped memory for _fused_gat_forward.3']
    %9 = vsyncpa [#allocation5], 0
    // Predicated region
    $region2: #{_fused_gat_forward.3} parent=1 // pred_check
      _
    $region3: #{_fused_gat_forward.3} parent=1 // pred_check_branch
      %11 = sbr.rel (0) target = $region5
    $region4: #{_fused_gat_forward.3} parent=1 // pred_region
      _
    $region5: #{_fused_gat_forward.3} parent=1 // pred_fallthru
      _
    // Predicated region
    $region6: #{_fused_gat_forward.3} parent=1 // pred_check
      _
    $region7: #{_fused_gat_forward.3} parent=1 // pred_check_branch
      %13 = sbr.rel (0) target = $region9
    $region8: #{_fused_gat_forward.3} parent=1 // pred_region
      _
    $region9: #{_fused_gat_forward.3} parent=1 // pred_fallthru
      _
    // Predicated region
    $region10: #{_fused_gat_forward.3} parent=1 // pred_check
      _
    $region11: #{_fused_gat_forward.3} parent=1 // pred_check_branch
      %15 = sbr.rel (0) target = $region13
    $region12: #{_fused_gat_forward.3} parent=1 // pred_region
      _
    $region13: #{_fused_gat_forward.3} parent=1 // pred_fallthru
      _
    // Predicated region
    $region14: #{_fused_gat_forward.3} parent=1 // pred_check
      _
    $region15: #{_fused_gat_forward.3} parent=1 // pred_check_branch
      %17 = sbr.rel (0) target = $region17
    $region16: #{_fused_gat_forward.3} parent=1 // pred_region
      _
    $region17: #{_fused_gat_forward.3} parent=1 // pred_fallthru
      _
    %p20 = scmp.eq.s32.totalorder 0, 0
    // Predicated region
    $region18: #{_fused_gat_forward.3} parent=1 // pred_check
      %p21 = pneg %p20
    $region19: #{_fused_gat_forward.3} parent=1 // pred_check_branch
      %23 = sbr.rel (%p21) target = $region21
    $region20: #{_fused_gat_forward.3} parent=1 // pred_region
      %vm24 = vcmask 130048
      %25 = vst.msk [vmem:[#allocation2] sm:$0xff] %vm24, 0.0
      %vm26 = vcmask 7168
      %27 = vst.msk [vmem:[#allocation3] sm:$0xff] %vm26, 0.0
    $region21: #{_fused_gat_forward.3} parent=1 // pred_fallthru
      _
    %v28 = vld [vmem:[%s0] sm:$0xf]
    %v29 = vld [vmem:[%s1] sm:$0xff]
    %v30 = vld [vmem:[%s2] sm:$0xff]
    %vm31 = vcmask 64512
    %v33 = vsel %vm31, %v29, 0
    %35 = vmatprep.subr.mxu0 0.0
    %36 = vmatpush1.msra.mxu0 %v30
    %37 = vmatprep.subr.mxu0 0.0
    %38 = vmatpush1.msra.mxu0 0.0
    %39 = vmatprep.subr.mxu0 0.0
    %40 = vmatpush1.msra.mxu0 0.0
    %41 = vmatprep.subr.mxu0 0.0
    %42 = vmatpush1.msra.mxu0 0.0
    %43 = vmatprep.subr.mxu0 0.0
    %44 = vmatpush1.msra.mxu0 0.0
    %45 = vmatprep.subr.mxu0 0.0
    %46 = vmatpush1.msra.mxu0 0.0
    %47 = vmatprep.subr.mxu0 0.0
    %48 = vmatpush1.msra.mxu0 0.0
    %49 = vmatprep.subr.mxu0 0.0
    %50 = vmatpush1.msra.mxu0 0.0
    %51 = vmatprep.subr.mxu0 0.0
    %52 = vmatpush1.msra.mxu0 0.0
    %53 = vmatprep.subr.mxu0 0.0
    %54 = vmatpush1.msra.mxu0 0.0
    %55 = vmatprep.subr.mxu0 0.0
    %56 = vmatpush1.msra.mxu0 0.0
    %57 = vmatprep.subr.mxu0 0.0
    %58 = vmatpush1.msra.mxu0 0.0
    %59 = vmatprep.subr.mxu0 0.0
    %60 = vmatpush1.msra.mxu0 0.0
    %61 = vmatprep.subr.mxu0 0.0
    %62 = vmatpush1.msra.mxu0 0.0
    %63 = vmatprep.subr.mxu0 0.0
    %64 = vmatpush1.msra.mxu0 0.0
    %65 = vmatprep.subr.mxu0 0.0
    %66 = vmatpush1.msra.mxu0 0.0
    %67 = vmatprep.subr.mxu0 0.0
    %68 = vmatpush1.msra.mxu0 0.0
    %69 = vmatprep.subr.mxu0 0.0
    %70 = vmatpush1.msra.mxu0 0.0
    %71 = vmatprep.subr.mxu0 0.0
    %72 = vmatpush1.msra.mxu0 0.0
    %73 = vmatprep.subr.mxu0 0.0
    %74 = vmatpush1.msra.mxu0 0.0
    %75 = vmatprep.subr.mxu0 0.0
    %76 = vmatpush1.msra.mxu0 0.0
    %77 = vmatprep.subr.mxu0 0.0
    %78 = vmatpush1.msra.mxu0 0.0
    %79 = vmatprep.subr.mxu0 0.0
    %80 = vmatpush1.msra.mxu0 0.0
    %81 = vmatprep.subr.mxu0 0.0
    %82 = vmatpush1.msra.mxu0 0.0
    %83 = vmatprep.subr.mxu0 0.0
    %84 = vmatpush1.msra.mxu0 0.0
    %85 = vmatprep.subr.mxu0 0.0
    %86 = vmatpush1.msra.mxu0 0.0
    %87 = vmatprep.subr.mxu0 0.0
    %88 = vmatpush1.msra.mxu0 0.0
    %89 = vmatprep.subr.mxu0 0.0
    %90 = vmatpush1.msra.mxu0 0.0
    %91 = vmatprep.subr.mxu0 0.0
    %92 = vmatpush1.msra.mxu0 0.0
    %93 = vmatprep.subr.mxu0 0.0
    %94 = vmatpush1.msra.mxu0 0.0
    %95 = vmatprep.subr.mxu0 0.0
    %96 = vmatpush1.msra.mxu0 0.0
    %97 = vmatprep.subr.mxu0 0.0
    %98 = vmatpush1.msra.mxu0 0.0
    %99 = vmatprep.mubr.f32.mxu0 0.0
    %100 = vmatmul.mubr.f32.gmra.mrb[0].mxu0 %v33
    %v101 = vpop.f32.mrb[0].mxu0
    %v102 = vadd.f32 0.0, %v101
    %v103 = vpop.f32.mrb[0].mxu0
    %104 = vdwg.mxu0
    %v105 = vpack.c.bf16 %v102, %v102
    %v106 = vld [vmem:[#allocation2] sm:$0xff]
    %v108 = vsel %vm31, %v28, 0
    %vm110 = vcmask 1043456
    %v112 = vsel %vm110, %v105, 0
    %114 = vmatprep.subr.bf16.mxu0 0
    %115 = vmatpush1.bf16.msra.mxu0 %v112
    %116 = vmatprep.subr.bf16.mxu0 0
    %117 = vmatpush1.bf16.msra.mxu0 0
    %118 = vmatprep.subr.bf16.mxu0 0
    %119 = vmatpush1.bf16.msra.mxu0 0
    %120 = vmatprep.subr.bf16.mxu0 0
    %121 = vmatpush1.bf16.msra.mxu0 0
    %122 = vmatprep.subr.bf16.mxu0 0
    %123 = vmatpush1.bf16.msra.mxu0 0
    %124 = vmatprep.subr.bf16.mxu0 0
    %125 = vmatpush1.bf16.msra.mxu0 0
    %126 = vmatprep.subr.bf16.mxu0 0
    %127 = vmatpush1.bf16.msra.mxu0 0
    %128 = vmatprep.subr.bf16.mxu0 0
    %129 = vmatpush1.bf16.msra.mxu0 0
    %130 = vmatprep.subr.bf16.mxu0 0
    %131 = vmatpush1.bf16.msra.mxu0 0
    %132 = vmatprep.subr.bf16.mxu0 0
    %133 = vmatpush1.bf16.msra.mxu0 0
    %134 = vmatprep.subr.bf16.mxu0 0
    %135 = vmatpush1.bf16.msra.mxu0 0
    %136 = vmatprep.subr.bf16.mxu0 0
    %137 = vmatpush1.bf16.msra.mxu0 0
    %138 = vmatprep.subr.bf16.mxu0 0
    %139 = vmatpush1.bf16.msra.mxu0 0
    %140 = vmatprep.subr.bf16.mxu0 0
    %141 = vmatpush1.bf16.msra.mxu0 0
    %142 = vmatprep.subr.bf16.mxu0 0
    %143 = vmatpush1.bf16.msra.mxu0 0
    %144 = vmatprep.subr.bf16.mxu0 0
    %145 = vmatpush1.bf16.msra.mxu0 0
    %146 = vmatprep.mubr.bf16.mxu0 0
    %147 = vmatmul.mubr.bf16.gmra.mrb[0].mxu0 %v108
    %v148 = vpop.f32.mrb[0].mxu0
    %v149 = vadd.f32 0.0, %v148
    %v150 = vpop.f32.mrb[0].mxu0
    %v151 = vpop.f32.mrb[0].mxu0
    %v152 = vpop.f32.mrb[0].mxu0
    %153 = vdwg.mxu0
    %v154 = vadd.f32 %v106, %v149
    %vm155 = vcmask 130048
    %156 = vst.msk [vmem:[#allocation2] sm:$0xff] %vm155, %v154
    %v157 = vld [vmem:[#allocation3] sm:$0xff]
    %v159 = vsel %vm110, 1065369472, 0
    %161 = vmatprep.subr.bf16.mxu0 0
    %162 = vmatpush1.bf16.msra.mxu0 %v159
    %163 = vmatprep.subr.bf16.mxu0 0
    %164 = vmatpush1.bf16.msra.mxu0 0
    %165 = vmatprep.subr.bf16.mxu0 0
    %166 = vmatpush1.bf16.msra.mxu0 0
    %167 = vmatprep.subr.bf16.mxu0 0
    %168 = vmatpush1.bf16.msra.mxu0 0
    %169 = vmatprep.subr.bf16.mxu0 0
    %170 = vmatpush1.bf16.msra.mxu0 0
    %171 = vmatprep.subr.bf16.mxu0 0
    %172 = vmatpush1.bf16.msra.mxu0 0
    %173 = vmatprep.subr.bf16.mxu0 0
    %174 = vmatpush1.bf16.msra.mxu0 0
    %175 = vmatprep.subr.bf16.mxu0 0
    %176 = vmatpush1.bf16.msra.mxu0 0
    %177 = vmatprep.subr.bf16.mxu0 0
    %178 = vmatpush1.bf16.msra.mxu0 0
    %179 = vmatprep.subr.bf16.mxu0 0
    %180 = vmatpush1.bf16.msra.mxu0 0
    %181 = vmatprep.subr.bf16.mxu0 0
    %182 = vmatpush1.bf16.msra.mxu0 0
    %183 = vmatprep.subr.bf16.mxu0 0
    %184 = vmatpush1.bf16.msra.mxu0 0
    %185 = vmatprep.subr.bf16.mxu0 0
    %186 = vmatpush1.bf16.msra.mxu0 0
    %187 = vmatprep.subr.bf16.mxu0 0
    %188 = vmatpush1.bf16.msra.mxu0 0
    %189 = vmatprep.subr.bf16.mxu0 0
    %190 = vmatpush1.bf16.msra.mxu0 0
    %191 = vmatprep.subr.bf16.mxu0 0
    %192 = vmatpush1.bf16.msra.mxu0 0
    %193 = vmatprep.mubr.bf16.mxu0 0
    %194 = vmatmul.mubr.bf16.gmra.mrb[0].mxu0 %v108
    %v195 = vpop.f32.mrb[0].mxu0
    %v196 = vadd.f32 0.0, %v195
    %v197 = vpop.f32.mrb[0].mxu0
    %v198 = vpop.f32.mrb[0].mxu0
    %v199 = vpop.f32.mrb[0].mxu0
    %200 = vdwg.mxu0
    %v201 = vadd.f32 %v157, %v196
    %vm202 = vcmask 7168
    %203 = vst.msk [vmem:[#allocation3] sm:$0xff] %vm202, %v201
    // Predicated region
    $region22: #{_fused_gat_forward.3} parent=1 // pred_check
      %p204 = pneg %p20
    $region23: #{_fused_gat_forward.3} parent=1 // pred_check_branch
      %206 = sbr.rel (%p204) target = $region25
    $region24: #{_fused_gat_forward.3} parent=1 // pred_region
      %v207 = vld [vmem:[#allocation3] sm:$0xff]
      %vm208 = vcmp.gt.f32.partialorder %v207, 0.0
      %v209 = vsel %vm208, %v207, 8.0
      %v210 = vrcp.pop %v209
      %v211 = vld [vmem:[#allocation2] sm:$0xff]
      %v212 = vld [vmem:[%s3] sm:$0x1]
      %v213 = vsel %vm208, 1, 0
      %214 = vset.pattern.permute.xlu0 0
      %215 = vperm.xlu0 %214, %v213
      %v216 = vpop.permute.xlu0 %215
      %vm217 = vcmp.eq.s32.totalorder %v216, 1
      %v219 = vlaneseq
      %v220 = vshrl.u32 %v219, 7
      %v221 = vsub.s32 0, %v220
      %v222 = vrot.slane %v212, %v221
      %v224 = vsel %vm217, %v211, %v222
      %226 = vset.pattern.permute.xlu0 0
      %227 = vperm.xlu0 %226, %v210
      %v228 = vpop.permute.xlu0 %227
      %v230 = vmul.f32 %v224, %v228
      %v231 = vsub.f32 0.0, %v230
      %v232 = vmul.f32 %v231, 1.442695
      %v233 = vpow.pop %v232
      %v234 = vadd.f32 %v233, 1.0
      %v235 = vrcp.pop %v234
      %236 = vst.msk [vmem:[#allocation4] sm:$0xff] %vm155, %v235
    $region25: #{_fused_gat_forward.3} parent=1 // pred_fallthru
      _
    // Predicated region
    $region26: #{_fused_gat_forward.3} parent=1 // pred_check
      _
    $region27: #{_fused_gat_forward.3} parent=1 // pred_check_branch
      %238 = sbr.rel (0) target = $region29
    $region28: #{_fused_gat_forward.3} parent=1 // pred_region
      %s240 = ssub.s32 128, 128
      %241 = vsyncadd [#allocation5], %s240
      %s243 = sshll.u32 [#allocation4], 4
      %s244 = int_to_ptr.vmem [resolvable:$true] %s243
      %246 = dma.vmem_to_hbm [thread:$0]  %s244, 128, %s4, [#allocation5]
    $region29: #{_fused_gat_forward.3} parent=1 // pred_fallthru
      _
    // Predicated region
    $region30: #{_fused_gat_forward.3} parent=1 // pred_check
      _
    $region31: #{_fused_gat_forward.3} parent=1 // pred_check_branch
      %248 = sbr.rel (0) target = $region33
    $region32: #{_fused_gat_forward.3} parent=1 // pred_region
      %249 = dma.done [#allocation5], 128
    $region33: #{_fused_gat_forward.3} parent=1 // pred_fallthru
      _
    %250 = vsyncpa [#allocation5], 1

// kernel: _fused_gat_forward.2
$region0: #{_fused_gat_forward.2}
  #allocation0 [shape = 'u32[]', space=smem, size = 0x4, offset = 0x4, fixed_abs, tag = 'smem constant byte address 0x4 - core index']
  #allocation1 [shape = 'u32[144,128]{1,0:T(1,128)}', space=vmem, size = 0x12000, scoped, tag = 'internal scratch']
  #allocation2 [shape = 'f32[8,8]{1,0:T(8,128)}', space=vmem, size = 0x1000, scoped, tag = 'scratch operand']
  #allocation3 [shape = 'f32[8,1]{1,0:T(8,128)}', space=vmem, size = 0x1000, scoped, tag = 'scratch operand']
  %s0 = inlined_call_operand.vmem [shape: bf16[8,8], index: 0, kind: input, shape index: {}]
  %s1 = inlined_call_operand.vmem [shape: f32[8,4], index: 1, kind: input, shape index: {}]
  %s2 = inlined_call_operand.vmem [shape: f32[4,8], index: 2, kind: input, shape index: {}]
  %s3 = inlined_call_operand.vmem [shape: f32[1,8], index: 3, kind: input, shape index: {}]
  %s4 = inlined_call_operand.vmem [shape: f32[8,8], index: 4, kind: output, shape index: {}]
  %s5 = sld [smem:[#allocation0]]
  $region34: #{_fused_gat_forward.2} parent=0
    _
  %s7 = ssub.s32 1, %s5
  %s8 = scalar_select 0, %s7, %s5
  // Predicated region
  $region2: #{_fused_gat_forward.2} parent=0 // pred_check
    _
  $region3: #{_fused_gat_forward.2} parent=0 // pred_check_branch
    %10 = sbr.rel (0) target = $region5
  $region4: #{_fused_gat_forward.2} parent=0 // pred_region
    _
  $region5: #{_fused_gat_forward.2} parent=0 // pred_fallthru
    _
  // Predicated region
  $region6: #{_fused_gat_forward.2} parent=0 // pred_check
    _
  $region7: #{_fused_gat_forward.2} parent=0 // pred_check_branch
    %12 = sbr.rel (0) target = $region9
  $region8: #{_fused_gat_forward.2} parent=0 // pred_region
    _
  $region9: #{_fused_gat_forward.2} parent=0 // pred_fallthru
    _
  // Predicated region
  $region10: #{_fused_gat_forward.2} parent=0 // pred_check
    _
  $region11: #{_fused_gat_forward.2} parent=0 // pred_check_branch
    %14 = sbr.rel (0) target = $region13
  $region12: #{_fused_gat_forward.2} parent=0 // pred_region
    _
  $region13: #{_fused_gat_forward.2} parent=0 // pred_fallthru
    _
  // Predicated region
  $region14: #{_fused_gat_forward.2} parent=0 // pred_check
    _
  $region15: #{_fused_gat_forward.2} parent=0 // pred_check_branch
    %16 = sbr.rel (0) target = $region17
  $region16: #{_fused_gat_forward.2} parent=0 // pred_region
    _
  $region17: #{_fused_gat_forward.2} parent=0 // pred_fallthru
    _
  %p19 = scmp.eq.s32.totalorder 0, 0
  // Predicated region
  $region18: #{_fused_gat_forward.2} parent=0 // pred_check
    %p20 = pneg %p19
  $region19: #{_fused_gat_forward.2} parent=0 // pred_check_branch
    %22 = sbr.rel (%p20) target = $region21
  $region20: #{_fused_gat_forward.2} parent=0 // pred_region
    %vm23 = vcmask 64512
    %24 = vst.msk [vmem:[#allocation2] sm:$0xff] %vm23, 0.0
    %vm25 = vcmask 7168
    %26 = vst.msk [vmem:[#allocation3] sm:$0xff] %vm25, 0.0
  $region21: #{_fused_gat_forward.2} parent=0 // pred_fallthru
    _
  %v27 = vld [vmem:[%s0] sm:$0xf]
  %v28 = vld [vmem:[%s1] sm:$0xff]
  %v29 = vld [vmem:[%s2] sm:$0xf]
  %vm30 = vcmask 31744
  %v32 = vsel %vm30, %v28, 0
  %vm34 = vcmask 1043456
  %v36 = vsel %vm34, %v29, 0
  %38 = vmatprep.subr.mxu0 0.0
  %39 = vmatpush1.msra.mxu0 %v36
  %40 = vmatprep.subr.mxu0 0.0
  %41 = vmatpush1.msra.mxu0 0.0
  %42 = vmatprep.subr.mxu0 0.0
  %43 = vmatpush1.msra.mxu0 0.0
  %44 = vmatprep.subr.mxu0 0.0
  %45 = vmatpush1.msra.mxu0 0.0
  %46 = vmatprep.subr.mxu0 0.0
  %47 = vmatpush1.msra.mxu0 0.0
  %48 = vmatprep.subr.mxu0 0.0
  %49 = vmatpush1.msra.mxu0 0.0
  %50 = vmatprep.subr.mxu0 0.0
  %51 = vmatpush1.msra.mxu0 0.0
  %52 = vmatprep.subr.mxu0 0.0
  %53 = vmatpush1.msra.mxu0 0.0
  %54 = vmatprep.subr.mxu0 0.0
  %55 = vmatpush1.msra.mxu0 0.0
  %56 = vmatprep.subr.mxu0 0.0
  %57 = vmatpush1.msra.mxu0 0.0
  %58 = vmatprep.subr.mxu0 0.0
  %59 = vmatpush1.msra.mxu0 0.0
  %60 = vmatprep.subr.mxu0 0.0
  %61 = vmatpush1.msra.mxu0 0.0
  %62 = vmatprep.subr.mxu0 0.0
  %63 = vmatpush1.msra.mxu0 0.0
  %64 = vmatprep.subr.mxu0 0.0
  %65 = vmatpush1.msra.mxu0 0.0
  %66 = vmatprep.subr.mxu0 0.0
  %67 = vmatpush1.msra.mxu0 0.0
  %68 = vmatprep.subr.mxu0 0.0
  %69 = vmatpush1.msra.mxu0 0.0
  %70 = vmatprep.subr.mxu0 0.0
  %71 = vmatpush1.msra.mxu0 0.0
  %72 = vmatprep.subr.mxu0 0.0
  %73 = vmatpush1.msra.mxu0 0.0
  %74 = vmatprep.subr.mxu0 0.0
  %75 = vmatpush1.msra.mxu0 0.0
  %76 = vmatprep.subr.mxu0 0.0
  %77 = vmatpush1.msra.mxu0 0.0
  %78 = vmatprep.subr.mxu0 0.0
  %79 = vmatpush1.msra.mxu0 0.0
  %80 = vmatprep.subr.mxu0 0.0
  %81 = vmatpush1.msra.mxu0 0.0
  %82 = vmatprep.subr.mxu0 0.0
  %83 = vmatpush1.msra.mxu0 0.0
  %84 = vmatprep.subr.mxu0 0.0
  %85 = vmatpush1.msra.mxu0 0.0
  %86 = vmatprep.subr.mxu0 0.0
  %87 = vmatpush1.msra.mxu0 0.0
  %88 = vmatprep.subr.mxu0 0.0
  %89 = vmatpush1.msra.mxu0 0.0
  %90 = vmatprep.subr.mxu0 0.0
  %91 = vmatpush1.msra.mxu0 0.0
  %92 = vmatprep.subr.mxu0 0.0
  %93 = vmatpush1.msra.mxu0 0.0
  %94 = vmatprep.subr.mxu0 0.0
  %95 = vmatpush1.msra.mxu0 0.0
  %96 = vmatprep.subr.mxu0 0.0
  %97 = vmatpush1.msra.mxu0 0.0
  %98 = vmatprep.subr.mxu0 0.0
  %99 = vmatpush1.msra.mxu0 0.0
  %100 = vmatprep.subr.mxu0 0.0
  %101 = vmatpush1.msra.mxu0 0.0
  %102 = vmatprep.mubr.f32.mxu0 0.0
  %103 = vmatmul.mubr.f32.gmra.mrb[0].mxu0 %v32
  %v104 = vpop.f32.mrb[0].mxu0
  %v105 = vadd.f32 0.0, %v104
  %v106 = vpop.f32.mrb[0].mxu0
  %107 = vdwg.mxu0
  %v108 = vpack.c.bf16 %v105, %v105
  %v109 = vld [vmem:[#allocation2] sm:$0xff]
  %vm110 = vcmask 64512
  %v112 = vsel %vm110, %v27, 0
  %v115 = vsel %vm34, %v108, 0
  %117 = vmatprep.subr.bf16.mxu0 0
  %118 = vmatpush1.bf16.msra.mxu0 %v115
  %119 = vmatprep.subr.bf16.mxu0 0
  %120 = vmatpush1.bf16.msra.mxu0 0
  %121 = vmatprep.subr.bf16.mxu0 0
  %122 = vmatpush1.bf16.msra.mxu0 0
  %123 = vmatprep.subr.bf16.mxu0 0
  %124 = vmatpush1.bf16.msra.mxu0 0
  %125 = vmatprep.subr.bf16.mxu0 0
  %126 = vmatpush1.bf16.msra.mxu0 0
  %127 = vmatprep.subr.bf16.mxu0 0
  %128 = vmatpush1.bf16.msra.mxu0 0
  %129 = vmatprep.subr.bf16.mxu0 0
  %130 = vmatpush1.bf16.msra.mxu0 0
  %131 = vmatprep.subr.bf16.mxu0 0
  %132 = vmatpush1.bf16.msra.mxu0 0
  %133 = vmatprep.subr.bf16.mxu0 0
  %134 = vmatpush1.bf16.msra.mxu0 0
  %135 = vmatprep.subr.bf16.mxu0 0
  %136 = vmatpush1.bf16.msra.mxu0 0
  %137 = vmatprep.subr.bf16.mxu0 0
  %138 = vmatpush1.bf16.msra.mxu0 0
  %139 = vmatprep.subr.bf16.mxu0 0
  %140 = vmatpush1.bf16.msra.mxu0 0
  %141 = vmatprep.subr.bf16.mxu0 0
  %142 = vmatpush1.bf16.msra.mxu0 0
  %143 = vmatprep.subr.bf16.mxu0 0
  %144 = vmatpush1.bf16.msra.mxu0 0
  %145 = vmatprep.subr.bf16.mxu0 0
  %146 = vmatpush1.bf16.msra.mxu0 0
  %147 = vmatprep.subr.bf16.mxu0 0
  %148 = vmatpush1.bf16.msra.mxu0 0
  %149 = vmatprep.mubr.bf16.mxu0 0
  %150 = vmatmul.mubr.bf16.gmra.mrb[0].mxu0 %v112
  %v151 = vpop.f32.mrb[0].mxu0
  %v152 = vadd.f32 0.0, %v151
  %v153 = vpop.f32.mrb[0].mxu0
  %v154 = vpop.f32.mrb[0].mxu0
  %v155 = vpop.f32.mrb[0].mxu0
  %156 = vdwg.mxu0
  %v157 = vadd.f32 %v109, %v152
  %158 = vst.msk [vmem:[#allocation2] sm:$0xff] %vm110, %v157
  %v159 = vld [vmem:[#allocation3] sm:$0xff]
  %v161 = vsel %vm34, 1065369472, 0
  %163 = vmatprep.subr.bf16.mxu0 0
  %164 = vmatpush1.bf16.msra.mxu0 %v161
  %165 = vmatprep.subr.bf16.mxu0 0
  %166 = vmatpush1.bf16.msra.mxu0 0
  %167 = vmatprep.subr.bf16.mxu0 0
  %168 = vmatpush1.bf16.msra.mxu0 0
  %169 = vmatprep.subr.bf16.mxu0 0
  %170 = vmatpush1.bf16.msra.mxu0 0
  %171 = vmatprep.subr.bf16.mxu0 0
  %172 = vmatpush1.bf16.msra.mxu0 0
  %173 = vmatprep.subr.bf16.mxu0 0
  %174 = vmatpush1.bf16.msra.mxu0 0
  %175 = vmatprep.subr.bf16.mxu0 0
  %176 = vmatpush1.bf16.msra.mxu0 0
  %177 = vmatprep.subr.bf16.mxu0 0
  %178 = vmatpush1.bf16.msra.mxu0 0
  %179 = vmatprep.subr.bf16.mxu0 0
  %180 = vmatpush1.bf16.msra.mxu0 0
  %181 = vmatprep.subr.bf16.mxu0 0
  %182 = vmatpush1.bf16.msra.mxu0 0
  %183 = vmatprep.subr.bf16.mxu0 0
  %184 = vmatpush1.bf16.msra.mxu0 0
  %185 = vmatprep.subr.bf16.mxu0 0
  %186 = vmatpush1.bf16.msra.mxu0 0
  %187 = vmatprep.subr.bf16.mxu0 0
  %188 = vmatpush1.bf16.msra.mxu0 0
  %189 = vmatprep.subr.bf16.mxu0 0
  %190 = vmatpush1.bf16.msra.mxu0 0
  %191 = vmatprep.subr.bf16.mxu0 0
  %192 = vmatpush1.bf16.msra.mxu0 0
  %193 = vmatprep.subr.bf16.mxu0 0
  %194 = vmatpush1.bf16.msra.mxu0 0
  %195 = vmatprep.mubr.bf16.mxu0 0
  %196 = vmatmul.mubr.bf16.gmra.mrb[0].mxu0 %v112
  %v197 = vpop.f32.mrb[0].mxu0
  %v198 = vadd.f32 0.0, %v197
  %v199 = vpop.f32.mrb[0].mxu0
  %v200 = vpop.f32.mrb[0].mxu0
  %v201 = vpop.f32.mrb[0].mxu0
  %202 = vdwg.mxu0
  %v203 = vadd.f32 %v159, %v198
  %vm204 = vcmask 7168
  %205 = vst.msk [vmem:[#allocation3] sm:$0xff] %vm204, %v203
  // Predicated region
  $region22: #{_fused_gat_forward.2} parent=0 // pred_check
    %p206 = pneg %p19
  $region23: #{_fused_gat_forward.2} parent=0 // pred_check_branch
    %208 = sbr.rel (%p206) target = $region25
  $region24: #{_fused_gat_forward.2} parent=0 // pred_region
    %v209 = vld [vmem:[#allocation3] sm:$0xff]
    %vm210 = vcmp.gt.f32.partialorder %v209, 0.0
    %v211 = vsel %vm210, %v209, 8.0
    %v212 = vrcp.pop %v211
    %v213 = vld [vmem:[#allocation2] sm:$0xff]
    %v214 = vld [vmem:[%s3] sm:$0x1]
    %v215 = vsel %vm210, 1, 0
    %216 = vset.pattern.permute.xlu0 0
    %217 = vperm.xlu0 %216, %v215
    %v218 = vpop.permute.xlu0 %217
    %vm219 = vcmp.eq.s32.totalorder %v218, 1
    %v221 = vlaneseq
    %v222 = vshrl.u32 %v221, 7
    %v223 = vsub.s32 0, %v222
    %v224 = vrot.slane %v214, %v223
    %v226 = vsel %vm219, %v213, %v224
    %228 = vset.pattern.permute.xlu0 0
    %229 = vperm.xlu0 %228, %v212
    %v230 = vpop.permute.xlu0 %229
    %v232 = vmul.f32 %v226, %v230
    %vm233 = vcmp.gt.f32.partialorder %v232, 0.0
    %v234 = vmin.f32 %v232, 0.0
    %v235 = vmul.f32 %v234, 1.442695
    %v236 = vpow.pop %v235
    %v237 = vsub.f32 %v236, 1.0
    %v238 = vsel %vm233, %v232, %v237
    %239 = vst.msk [vmem:[%s4] sm:$0xff] %vm110, %v238
  $region25: #{_fused_gat_forward.2} parent=0 // pred_fallthru
    _
  // Predicated region
  $region26: #{_fused_gat_forward.2} parent=0 // pred_check
    _
  $region27: #{_fused_gat_forward.2} parent=0 // pred_check_branch
    %241 = sbr.rel (0) target = $region29
  $region28: #{_fused_gat_forward.2} parent=0 // pred_region
    _
  $region29: #{_fused_gat_forward.2} parent=0 // pred_fallthru
    _
  // Predicated region
  $region30: #{_fused_gat_forward.2} parent=0 // pred_check
    _
  $region31: #{_fused_gat_forward.2} parent=0 // pred_check_branch
    %243 = sbr.rel (0) target = $region33
  $region32: #{_fused_gat_forward.2} parent=0 // pred_region
    _
  $region33: #{_fused_gat_forward.2} parent=0 // pred_fallthru
    _

</llo_original>
